<compile_context>
chip_gen: v7x
topology: tpu7x:2x2x1
jax: 0.10.0
libtpu: 0.0.40
codegen_flags: <defaults>
</compile_context>

<pallas_src>
import jax
import jax.numpy as jnp
from jax.experimental import pallas as pl
from jax.experimental.pallas import tpu as pltpu


# -----------------------------------------------------------------------------
# Fused kernel: conv(3x3, same) + bias + BN(batch stats) + ReLU + 2x2 max-pool
# -----------------------------------------------------------------------------
def _make_encoder_kernel(B, Ho, KH, Cout, W, eps):
    H = 2 * Ho
    LANES = W * Cout            # conv-output lanes: [even w | odd w] x Cout  (=128)
    WOC = (W // 2) * Cout       # pooled-output lanes: wo x Cout              (=64)
    inv_n = 1.0 / float(B * H * W)

    def kernel(x_ref, m_ref, bias_ref, gamma_ref, beta_ref, o_ref):
        # x_ref:  (B*2, Hp//2, Wp*Cin) bf16 ; row (2b+p, r) = padded input row 2r+p of batch b
        # m_ref:  (KH, Wp*Cin, LANES)  bf16 ; banded 3x3 conv weights
        # bias_ref / gamma_ref / beta_ref: (1, LANES) f32 ; channel = lane % Cout
        # o_ref:  (B*Ho, WOC) f32 pooled output

        def conv_rows(b, p):
            # Conv rows h = 2r+p (r in [0,Ho)) of batch b, all output w, lane-dense.
            # 3 MXU matmuls (Ho, Wp*Cin) x (Wp*Cin, LANES); pure sublane-sliced loads.
            acc = jnp.zeros((Ho, LANES), jnp.float32)
            for dy in range(KH):
                src = p + dy                                   # padded row parity/offset
                lhs = x_ref[2 * b + (src % 2), pl.ds(src // 2, Ho), :]
                acc = acc + jnp.dot(lhs, m_ref[dy],
                                    preferred_element_type=jnp.float32)
            return acc + bias_ref[...]

        acc = [[conv_rows(b, p) for p in range(2)] for b in range(B)]

        # --- BatchNorm batch statistics (two-pass, f32) ---
        # chan_sum: per-channel sums across the W lane groups, replicated to every
        # lane via log2(LANES/Cout) circular rolls (XLU, free slot here).
        def chan_sum(v):
            s, off = v, LANES // 2
            while off >= Cout:
                s = s + pltpu.roll(s, shift=off, axis=1)
                off //= 2
            return s

        tot = jnp.zeros((1, LANES), jnp.float32)
        for b in range(B):
            for p in range(2):
                tot = tot + jnp.sum(acc[b][p], axis=0, keepdims=True)
        mean = chan_sum(tot) * inv_n                            # (1, LANES), per-channel

        ssq = jnp.zeros((1, LANES), jnp.float32)
        for b in range(B):
            for p in range(2):
                c = acc[b][p] - mean
                ssq = ssq + jnp.sum(c * c, axis=0, keepdims=True)
        scale = gamma_ref[...] * jax.lax.rsqrt(chan_sum(ssq) * inv_n + eps)
        beta = beta_ref[...]

        # --- BN affine + ReLU + 2x2 max-pool ---
        # width pairs   = the two lane halves (even-w | odd-w columns)
        # height pairs  = the two row-parity slabs
        for b in range(B):
            z0 = jnp.maximum((acc[b][0] - mean) * scale + beta, 0.0)   # even conv rows
            z1 = jnp.maximum((acc[b][1] - mean) * scale + beta, 0.0)   # odd  conv rows
            zw0 = jnp.maximum(z0[:, :WOC], z0[:, WOC:])
            zw1 = jnp.maximum(z1[:, :WOC], z1[:, WOC:])
            o_ref[pl.ds(b * Ho, Ho), :] = jnp.maximum(zw0, zw1)

    return kernel


# -----------------------------------------------------------------------------
# Wrapper: NCHW<->NHWC, padding, bf16 cast, banded weight build, pallas_call
# -----------------------------------------------------------------------------
def encoder_block(x_nchw, w_hwio, bias, gamma, beta, eps=1e-5):
    B, Cin, H, W = x_nchw.shape
    KH, KW, _, Cout = w_hwio.shape
    assert KH == 3 and KW == 3 and H % 2 == 0 and W % 2 == 0
    Ho, Wo = H // 2, W // 2
    Hp, Wp = H + KH - 1, W + KW - 1
    LANES = W * Cout
    WOC = Wo * Cout
    # The in-kernel per-channel roll ladder assumes power-of-two sizes.
    assert LANES & (LANES - 1) == 0 and Cout & (Cout - 1) == 0

    # ---- layout plumbing (XLA glue) ----
    x = jnp.transpose(x_nchw, (0, 2, 3, 1))                            # NHWC
    xp = jnp.pad(x, ((0, 0), (1, 1), (1, 1), (0, 0)))                  # "same" halo
    # TODO(synk): at larger H*W fold the halo into the kernel (zero-init VMEM scratch +
    #             interior DMA) instead of materializing the padded copy in HBM.
    xp = xp.astype(jnp.bfloat16).reshape(B, Hp, Wp * Cin)              # lane-dense rows
    # Split padded rows by parity so height-pool pairs live in separate slabs.
    x_par = jnp.stack([xp[:, 0::2, :], xp[:, 1::2, :]], axis=1)        # (B, 2, Hp//2, Wp*Cin)
    x_par = x_par.reshape(B * 2, Hp // 2, Wp * Cin)

    # Banded conv weights: the (KW*Cin, Cout) block for output column w sits at rows
    # [w*Cin, (w+KW)*Cin); even-w columns fill lanes [0, WOC), odd-w lanes [WOC, 2*WOC).
    wb = w_hwio.astype(jnp.bfloat16).reshape(KH, KW * Cin, Cout)
    def banded(ws):
        cols = [jnp.pad(wb, ((0, 0), (w * Cin, (Wp - w - KW) * Cin), (0, 0))) for w in ws]
        return jnp.concatenate(cols, axis=2)
    m_all = jnp.concatenate([banded(range(0, W, 2)), banded(range(1, W, 2))], axis=2)

    bias_l = jnp.tile(bias.astype(jnp.float32), W).reshape(1, LANES)
    gamma_l = jnp.tile(gamma.astype(jnp.float32), W).reshape(1, LANES)
    beta_l = jnp.tile(beta.astype(jnp.float32), W).reshape(1, LANES)

    out_flat = pl.pallas_call(
        _make_encoder_kernel(B, Ho, KH, Cout, W, eps),
        out_shape=jax.ShapeDtypeStruct((B * Ho, WOC), jnp.float32),
        # Whole problem in one fat step (launch/step overhead dominated before).
        # TODO(synk): at real sizes, tile over batch/row blocks with BN stats
        #             accumulated across an "arbitrary" grid axis so v7x's two
        #             TensorCores get work and VMEM stays bounded.
        grid=(1,),
        in_specs=[
            pl.BlockSpec((B * 2, Hp // 2, Wp * Cin), lambda i: (0, 0, 0)),
            pl.BlockSpec((KH, Wp * Cin, LANES), lambda i: (0, 0, 0)),
            pl.BlockSpec((1, LANES), lambda i: (0, 0)),
            pl.BlockSpec((1, LANES), lambda i: (0, 0)),
            pl.BlockSpec((1, LANES), lambda i: (0, 0)),
        ],
        out_specs=pl.BlockSpec((B * Ho, WOC), lambda i: (0, 0)),
        compiler_params=pltpu.CompilerParams(
            dimension_semantics=("arbitrary",),
            vmem_limit_bytes=32 * 1024 * 1024),
    )(x_par, m_all, bias_l, gamma_l, beta_l)

    # Dropout: identity (inference semantics).
    # TODO(synk): train-mode nn.Dropout(p=0.2) needs pltpu.prng_seed/prng_random_bits
    #             masking + 1/(1-p) scaling.
    # TODO(synk): BatchNorm running_mean/running_var buffers are not updated (stateless fwd).
    out = out_flat.reshape(B, Ho, Wo, Cout)                            # free row-major view
    return jnp.transpose(out, (0, 3, 1, 2))                            # back to NCHW


# -----------------------------------------------------------------------------
# Pure-JAX reference (correctness check)
# -----------------------------------------------------------------------------
def reference(x_nchw, w_hwio, bias, gamma, beta, eps=1e-5):
    x = jnp.transpose(x_nchw, (0, 2, 3, 1))
    y = jax.lax.conv_general_dilated(
        x, w_hwio, window_strides=(1, 1), padding=((1, 1), (1, 1)),
        dimension_numbers=("NHWC", "HWIO", "NHWC"),
        precision=jax.lax.Precision.HIGHEST) + bias
    mean = jnp.mean(y, axis=(0, 1, 2))
    var = jnp.mean((y - mean) ** 2, axis=(0, 1, 2))
    z = jnp.maximum((y - mean) * jax.lax.rsqrt(var + eps) * gamma + beta, 0.0)
    B, H, W, C = z.shape
    p = z.reshape(B, H // 2, 2, W // 2, 2, C).max(axis=(2, 4))
    return jnp.transpose(p, (0, 3, 1, 2))


if __name__ == "__main__":
    key = jax.random.PRNGKey(0)
    kx, kw, kb, kg, kbt = jax.random.split(key, 5)

    B, Cin, Cout, H, W = 2, 4, 8, 16, 16
    x = jax.random.normal(kx, (B, Cin, H, W), jnp.float32)
    w = jax.random.normal(kw, (3, 3, Cin, Cout), jnp.float32) * 0.1     # HWIO
    bias = jax.random.normal(kb, (Cout,), jnp.float32) * 0.1
    gamma = 1.0 + 0.1 * jax.random.normal(kg, (Cout,), jnp.float32)
    beta = 0.1 * jax.random.normal(kbt, (Cout,), jnp.float32)

    out = jax.block_until_ready(jax.jit(encoder_block)(x, w, bias, gamma, beta))
    ref = reference(x, w, bias, gamma, beta)

    assert out.shape == (B, Cout, H // 2, W // 2), out.shape
    max_err = float(jnp.max(jnp.abs(out - ref)))
    # Tolerance accounts for bf16 MXU operands (f32 accumulation) vs. f32 reference conv.
    assert max_err < 3e-2, f"max abs err {max_err}"
    print("KERNEL_OK")
</pallas_src>

<mosaic_0001>
module attributes {stable_mosaic.version = 11 : i64} {
  func.func @kernel(%arg0: i32, %arg1: memref<4x9x72xbf16, #tpu.memory_space<vmem>>, %arg2: memref<3x72x128xbf16, #tpu.memory_space<vmem>>, %arg3: memref<1x128xf32, #tpu.memory_space<vmem>>, %arg4: memref<1x128xf32, #tpu.memory_space<vmem>>, %arg5: memref<1x128xf32, #tpu.memory_space<vmem>>, %arg6: memref<16x64xf32, #tpu.memory_space<vmem>>) attributes {dimension_semantics = [#tpu.dimension_semantics<arbitrary>], iteration_bounds = array<i64: 1>, scalar_prefetch = 0 : i64, scratch_operands = 0 : i64, tpu.core_type = #tpu.core_type<tc>, window_params = [{pipeline_mode = #tpu.pipeline_mode<synchronous>, transform_indices = @transform_0, window_bounds = array<i64: 4, 9, 72>}, {pipeline_mode = #tpu.pipeline_mode<synchronous>, transform_indices = @transform_1, window_bounds = array<i64: 3, 72, 128>}, {pipeline_mode = #tpu.pipeline_mode<synchronous>, transform_indices = @transform_2, window_bounds = array<i64: 1, 128>}, {pipeline_mode = #tpu.pipeline_mode<synchronous>, transform_indices = @transform_3, window_bounds = array<i64: 1, 128>}, {pipeline_mode = #tpu.pipeline_mode<synchronous>, transform_indices = @transform_4, window_bounds = array<i64: 1, 128>}, {pipeline_mode = #tpu.pipeline_mode<synchronous>, transform_indices = @transform_5, window_bounds = array<i64: 16, 64>}]} {
    %cst = arith.constant 0.000000e+00 : f32
    %0 = vector.broadcast %cst : f32 to vector<8x128xf32>
    %c0 = arith.constant 0 : index
    %c0_0 = arith.constant 0 : index
    %c0_1 = arith.constant 0 : index
    %1 = vector.load %arg1[%c0, %c0_0, %c0_1] : memref<4x9x72xbf16, #tpu.memory_space<vmem>>, vector<1x8x72xbf16>
    %2 = vector.shape_cast %1 : vector<1x8x72xbf16> to vector<8x72xbf16>
    %c0_2 = arith.constant 0 : index
    %c0_3 = arith.constant 0 : index
    %c0_4 = arith.constant 0 : index
    %3 = vector.load %arg2[%c0_2, %c0_3, %c0_4] : memref<3x72x128xbf16, #tpu.memory_space<vmem>>, vector<1x72x128xbf16>
    %4 = vector.shape_cast %3 : vector<1x72x128xbf16> to vector<72x128xbf16>
    %cst_5 = arith.constant dense<0.000000e+00> : vector<8x128xf32>
    %5 = tpu.matmul %2, %4, %cst_5 {dimension_numbers = #tpu.dot_dimension_numbers<[1], [0], [0], [1], [0, 0, 1, 1], [], []>} : vector<8x72xbf16>, vector<72x128xbf16>, vector<8x128xf32> -> vector<8x128xf32>
    %6 = arith.addf %0, %5 : vector<8x128xf32>
    %c1 = arith.constant 1 : index
    %c0_6 = arith.constant 0 : index
    %c0_7 = arith.constant 0 : index
    %7 = vector.load %arg1[%c1, %c0_6, %c0_7] : memref<4x9x72xbf16, #tpu.memory_space<vmem>>, vector<1x8x72xbf16>
    %8 = vector.shape_cast %7 : vector<1x8x72xbf16> to vector<8x72xbf16>
    %c1_8 = arith.constant 1 : index
    %c0_9 = arith.constant 0 : index
    %c0_10 = arith.constant 0 : index
    %9 = vector.load %arg2[%c1_8, %c0_9, %c0_10] : memref<3x72x128xbf16, #tpu.memory_space<vmem>>, vector<1x72x128xbf16>
    %10 = vector.shape_cast %9 : vector<1x72x128xbf16> to vector<72x128xbf16>
    %cst_11 = arith.constant dense<0.000000e+00> : vector<8x128xf32>
    %11 = tpu.matmul %8, %10, %cst_11 {dimension_numbers = #tpu.dot_dimension_numbers<[1], [0], [0], [1], [0, 0, 1, 1], [], []>} : vector<8x72xbf16>, vector<72x128xbf16>, vector<8x128xf32> -> vector<8x128xf32>
    %12 = arith.addf %6, %11 : vector<8x128xf32>
    %c0_12 = arith.constant 0 : index
    %c1_13 = arith.constant 1 : index
    %c0_14 = arith.constant 0 : index
    %13 = vector.load %arg1[%c0_12, %c1_13, %c0_14] : memref<4x9x72xbf16, #tpu.memory_space<vmem>>, vector<1x8x72xbf16>
    %14 = vector.shape_cast %13 : vector<1x8x72xbf16> to vector<8x72xbf16>
    %c2 = arith.constant 2 : index
    %c0_15 = arith.constant 0 : index
    %c0_16 = arith.constant 0 : index
    %15 = vector.load %arg2[%c2, %c0_15, %c0_16] : memref<3x72x128xbf16, #tpu.memory_space<vmem>>, vector<1x72x128xbf16>
    %16 = vector.shape_cast %15 : vector<1x72x128xbf16> to vector<72x128xbf16>
    %cst_17 = arith.constant dense<0.000000e+00> : vector<8x128xf32>
    %17 = tpu.matmul %14, %16, %cst_17 {dimension_numbers = #tpu.dot_dimension_numbers<[1], [0], [0], [1], [0, 0, 1, 1], [], []>} : vector<8x72xbf16>, vector<72x128xbf16>, vector<8x128xf32> -> vector<8x128xf32>
    %18 = arith.addf %12, %17 : vector<8x128xf32>
    %c0_18 = arith.constant 0 : index
    %c0_19 = arith.constant 0 : index
    %19 = vector.load %arg3[%c0_18, %c0_19] : memref<1x128xf32, #tpu.memory_space<vmem>>, vector<1x128xf32>
    %20 = vector.broadcast %19 : vector<1x128xf32> to vector<8x128xf32>
    %21 = arith.addf %18, %20 : vector<8x128xf32>
    %cst_20 = arith.constant 0.000000e+00 : f32
    %22 = vector.broadcast %cst_20 : f32 to vector<8x128xf32>
    %c1_21 = arith.constant 1 : index
    %c0_22 = arith.constant 0 : index
    %c0_23 = arith.constant 0 : index
    %23 = vector.load %arg1[%c1_21, %c0_22, %c0_23] : memref<4x9x72xbf16, #tpu.memory_space<vmem>>, vector<1x8x72xbf16>
    %24 = vector.shape_cast %23 : vector<1x8x72xbf16> to vector<8x72xbf16>
    %c0_24 = arith.constant 0 : index
    %c0_25 = arith.constant 0 : index
    %c0_26 = arith.constant 0 : index
    %25 = vector.load %arg2[%c0_24, %c0_25, %c0_26] : memref<3x72x128xbf16, #tpu.memory_space<vmem>>, vector<1x72x128xbf16>
    %26 = vector.shape_cast %25 : vector<1x72x128xbf16> to vector<72x128xbf16>
    %cst_27 = arith.constant dense<0.000000e+00> : vector<8x128xf32>
    %27 = tpu.matmul %24, %26, %cst_27 {dimension_numbers = #tpu.dot_dimension_numbers<[1], [0], [0], [1], [0, 0, 1, 1], [], []>} : vector<8x72xbf16>, vector<72x128xbf16>, vector<8x128xf32> -> vector<8x128xf32>
    %28 = arith.addf %22, %27 : vector<8x128xf32>
    %c0_28 = arith.constant 0 : index
    %c1_29 = arith.constant 1 : index
    %c0_30 = arith.constant 0 : index
    %29 = vector.load %arg1[%c0_28, %c1_29, %c0_30] : memref<4x9x72xbf16, #tpu.memory_space<vmem>>, vector<1x8x72xbf16>
    %30 = vector.shape_cast %29 : vector<1x8x72xbf16> to vector<8x72xbf16>
    %c1_31 = arith.constant 1 : index
    %c0_32 = arith.constant 0 : index
    %c0_33 = arith.constant 0 : index
    %31 = vector.load %arg2[%c1_31, %c0_32, %c0_33] : memref<3x72x128xbf16, #tpu.memory_space<vmem>>, vector<1x72x128xbf16>
    %32 = vector.shape_cast %31 : vector<1x72x128xbf16> to vector<72x128xbf16>
    %cst_34 = arith.constant dense<0.000000e+00> : vector<8x128xf32>
    %33 = tpu.matmul %30, %32, %cst_34 {dimension_numbers = #tpu.dot_dimension_numbers<[1], [0], [0], [1], [0, 0, 1, 1], [], []>} : vector<8x72xbf16>, vector<72x128xbf16>, vector<8x128xf32> -> vector<8x128xf32>
    %34 = arith.addf %28, %33 : vector<8x128xf32>
    %c1_35 = arith.constant 1 : index
    %c1_36 = arith.constant 1 : index
    %c0_37 = arith.constant 0 : index
    %35 = vector.load %arg1[%c1_35, %c1_36, %c0_37] : memref<4x9x72xbf16, #tpu.memory_space<vmem>>, vector<1x8x72xbf16>
    %36 = vector.shape_cast %35 : vector<1x8x72xbf16> to vector<8x72xbf16>
    %c2_38 = arith.constant 2 : index
    %c0_39 = arith.constant 0 : index
    %c0_40 = arith.constant 0 : index
    %37 = vector.load %arg2[%c2_38, %c0_39, %c0_40] : memref<3x72x128xbf16, #tpu.memory_space<vmem>>, vector<1x72x128xbf16>
    %38 = vector.shape_cast %37 : vector<1x72x128xbf16> to vector<72x128xbf16>
    %cst_41 = arith.constant dense<0.000000e+00> : vector<8x128xf32>
    %39 = tpu.matmul %36, %38, %cst_41 {dimension_numbers = #tpu.dot_dimension_numbers<[1], [0], [0], [1], [0, 0, 1, 1], [], []>} : vector<8x72xbf16>, vector<72x128xbf16>, vector<8x128xf32> -> vector<8x128xf32>
    %40 = arith.addf %34, %39 : vector<8x128xf32>
    %c0_42 = arith.constant 0 : index
    %c0_43 = arith.constant 0 : index
    %41 = vector.load %arg3[%c0_42, %c0_43] : memref<1x128xf32, #tpu.memory_space<vmem>>, vector<1x128xf32>
    %42 = vector.broadcast %41 : vector<1x128xf32> to vector<8x128xf32>
    %43 = arith.addf %40, %42 : vector<8x128xf32>
    %cst_44 = arith.constant 0.000000e+00 : f32
    %44 = vector.broadcast %cst_44 : f32 to vector<8x128xf32>
    %c2_45 = arith.constant 2 : index
    %c0_46 = arith.constant 0 : index
    %c0_47 = arith.constant 0 : index
    %45 = vector.load %arg1[%c2_45, %c0_46, %c0_47] : memref<4x9x72xbf16, #tpu.memory_space<vmem>>, vector<1x8x72xbf16>
    %46 = vector.shape_cast %45 : vector<1x8x72xbf16> to vector<8x72xbf16>
    %c0_48 = arith.constant 0 : index
    %c0_49 = arith.constant 0 : index
    %c0_50 = arith.constant 0 : index
    %47 = vector.load %arg2[%c0_48, %c0_49, %c0_50] : memref<3x72x128xbf16, #tpu.memory_space<vmem>>, vector<1x72x128xbf16>
    %48 = vector.shape_cast %47 : vector<1x72x128xbf16> to vector<72x128xbf16>
    %cst_51 = arith.constant dense<0.000000e+00> : vector<8x128xf32>
    %49 = tpu.matmul %46, %48, %cst_51 {dimension_numbers = #tpu.dot_dimension_numbers<[1], [0], [0], [1], [0, 0, 1, 1], [], []>} : vector<8x72xbf16>, vector<72x128xbf16>, vector<8x128xf32> -> vector<8x128xf32>
    %50 = arith.addf %44, %49 : vector<8x128xf32>
    %c3 = arith.constant 3 : index
    %c0_52 = arith.constant 0 : index
    %c0_53 = arith.constant 0 : index
    %51 = vector.load %arg1[%c3, %c0_52, %c0_53] : memref<4x9x72xbf16, #tpu.memory_space<vmem>>, vector<1x8x72xbf16>
    %52 = vector.shape_cast %51 : vector<1x8x72xbf16> to vector<8x72xbf16>
    %c1_54 = arith.constant 1 : index
    %c0_55 = arith.constant 0 : index
    %c0_56 = arith.constant 0 : index
    %53 = vector.load %arg2[%c1_54, %c0_55, %c0_56] : memref<3x72x128xbf16, #tpu.memory_space<vmem>>, vector<1x72x128xbf16>
    %54 = vector.shape_cast %53 : vector<1x72x128xbf16> to vector<72x128xbf16>
    %cst_57 = arith.constant dense<0.000000e+00> : vector<8x128xf32>
    %55 = tpu.matmul %52, %54, %cst_57 {dimension_numbers = #tpu.dot_dimension_numbers<[1], [0], [0], [1], [0, 0, 1, 1], [], []>} : vector<8x72xbf16>, vector<72x128xbf16>, vector<8x128xf32> -> vector<8x128xf32>
    %56 = arith.addf %50, %55 : vector<8x128xf32>
    %c2_58 = arith.constant 2 : index
    %c1_59 = arith.constant 1 : index
    %c0_60 = arith.constant 0 : index
    %57 = vector.load %arg1[%c2_58, %c1_59, %c0_60] : memref<4x9x72xbf16, #tpu.memory_space<vmem>>, vector<1x8x72xbf16>
    %58 = vector.shape_cast %57 : vector<1x8x72xbf16> to vector<8x72xbf16>
    %c2_61 = arith.constant 2 : index
    %c0_62 = arith.constant 0 : index
    %c0_63 = arith.constant 0 : index
    %59 = vector.load %arg2[%c2_61, %c0_62, %c0_63] : memref<3x72x128xbf16, #tpu.memory_space<vmem>>, vector<1x72x128xbf16>
    %60 = vector.shape_cast %59 : vector<1x72x128xbf16> to vector<72x128xbf16>
    %cst_64 = arith.constant dense<0.000000e+00> : vector<8x128xf32>
    %61 = tpu.matmul %58, %60, %cst_64 {dimension_numbers = #tpu.dot_dimension_numbers<[1], [0], [0], [1], [0, 0, 1, 1], [], []>} : vector<8x72xbf16>, vector<72x128xbf16>, vector<8x128xf32> -> vector<8x128xf32>
    %62 = arith.addf %56, %61 : vector<8x128xf32>
    %c0_65 = arith.constant 0 : index
    %c0_66 = arith.constant 0 : index
    %63 = vector.load %arg3[%c0_65, %c0_66] : memref<1x128xf32, #tpu.memory_space<vmem>>, vector<1x128xf32>
    %64 = vector.broadcast %63 : vector<1x128xf32> to vector<8x128xf32>
    %65 = arith.addf %62, %64 : vector<8x128xf32>
    %cst_67 = arith.constant 0.000000e+00 : f32
    %66 = vector.broadcast %cst_67 : f32 to vector<8x128xf32>
    %c3_68 = arith.constant 3 : index
    %c0_69 = arith.constant 0 : index
    %c0_70 = arith.constant 0 : index
    %67 = vector.load %arg1[%c3_68, %c0_69, %c0_70] : memref<4x9x72xbf16, #tpu.memory_space<vmem>>, vector<1x8x72xbf16>
    %68 = vector.shape_cast %67 : vector<1x8x72xbf16> to vector<8x72xbf16>
    %c0_71 = arith.constant 0 : index
    %c0_72 = arith.constant 0 : index
    %c0_73 = arith.constant 0 : index
    %69 = vector.load %arg2[%c0_71, %c0_72, %c0_73] : memref<3x72x128xbf16, #tpu.memory_space<vmem>>, vector<1x72x128xbf16>
    %70 = vector.shape_cast %69 : vector<1x72x128xbf16> to vector<72x128xbf16>
    %cst_74 = arith.constant dense<0.000000e+00> : vector<8x128xf32>
    %71 = tpu.matmul %68, %70, %cst_74 {dimension_numbers = #tpu.dot_dimension_numbers<[1], [0], [0], [1], [0, 0, 1, 1], [], []>} : vector<8x72xbf16>, vector<72x128xbf16>, vector<8x128xf32> -> vector<8x128xf32>
    %72 = arith.addf %66, %71 : vector<8x128xf32>
    %c2_75 = arith.constant 2 : index
    %c1_76 = arith.constant 1 : index
    %c0_77 = arith.constant 0 : index
    %73 = vector.load %arg1[%c2_75, %c1_76, %c0_77] : memref<4x9x72xbf16, #tpu.memory_space<vmem>>, vector<1x8x72xbf16>
    %74 = vector.shape_cast %73 : vector<1x8x72xbf16> to vector<8x72xbf16>
    %c1_78 = arith.constant 1 : index
    %c0_79 = arith.constant 0 : index
    %c0_80 = arith.constant 0 : index
    %75 = vector.load %arg2[%c1_78, %c0_79, %c0_80] : memref<3x72x128xbf16, #tpu.memory_space<vmem>>, vector<1x72x128xbf16>
    %76 = vector.shape_cast %75 : vector<1x72x128xbf16> to vector<72x128xbf16>
    %cst_81 = arith.constant dense<0.000000e+00> : vector<8x128xf32>
    %77 = tpu.matmul %74, %76, %cst_81 {dimension_numbers = #tpu.dot_dimension_numbers<[1], [0], [0], [1], [0, 0, 1, 1], [], []>} : vector<8x72xbf16>, vector<72x128xbf16>, vector<8x128xf32> -> vector<8x128xf32>
    %78 = arith.addf %72, %77 : vector<8x128xf32>
    %c3_82 = arith.constant 3 : index
    %c1_83 = arith.constant 1 : index
    %c0_84 = arith.constant 0 : index
    %79 = vector.load %arg1[%c3_82, %c1_83, %c0_84] : memref<4x9x72xbf16, #tpu.memory_space<vmem>>, vector<1x8x72xbf16>
    %80 = vector.shape_cast %79 : vector<1x8x72xbf16> to vector<8x72xbf16>
    %c2_85 = arith.constant 2 : index
    %c0_86 = arith.constant 0 : index
    %c0_87 = arith.constant 0 : index
    %81 = vector.load %arg2[%c2_85, %c0_86, %c0_87] : memref<3x72x128xbf16, #tpu.memory_space<vmem>>, vector<1x72x128xbf16>
    %82 = vector.shape_cast %81 : vector<1x72x128xbf16> to vector<72x128xbf16>
    %cst_88 = arith.constant dense<0.000000e+00> : vector<8x128xf32>
    %83 = tpu.matmul %80, %82, %cst_88 {dimension_numbers = #tpu.dot_dimension_numbers<[1], [0], [0], [1], [0, 0, 1, 1], [], []>} : vector<8x72xbf16>, vector<72x128xbf16>, vector<8x128xf32> -> vector<8x128xf32>
    %84 = arith.addf %78, %83 : vector<8x128xf32>
    %c0_89 = arith.constant 0 : index
    %c0_90 = arith.constant 0 : index
    %85 = vector.load %arg3[%c0_89, %c0_90] : memref<1x128xf32, #tpu.memory_space<vmem>>, vector<1x128xf32>
    %86 = vector.broadcast %85 : vector<1x128xf32> to vector<8x128xf32>
    %87 = arith.addf %84, %86 : vector<8x128xf32>
    %cst_91 = arith.constant 0.000000e+00 : f32
    %88 = vector.broadcast %cst_91 : f32 to vector<1x128xf32>
    %cst_92 = arith.constant dense<0.000000e+00> : vector<128xf32>
    %89 = vector.multi_reduction <add>, %21, %cst_92 [0] : vector<8x128xf32> to vector<128xf32>
    %90 = vector.shape_cast %89 : vector<128xf32> to vector<1x128xf32>
    %91 = arith.addf %88, %90 : vector<1x128xf32>
    %cst_93 = arith.constant dense<0.000000e+00> : vector<128xf32>
    %92 = vector.multi_reduction <add>, %43, %cst_93 [0] : vector<8x128xf32> to vector<128xf32>
    %93 = vector.shape_cast %92 : vector<128xf32> to vector<1x128xf32>
    %94 = arith.addf %91, %93 : vector<1x128xf32>
    %cst_94 = arith.constant dense<0.000000e+00> : vector<128xf32>
    %95 = vector.multi_reduction <add>, %65, %cst_94 [0] : vector<8x128xf32> to vector<128xf32>
    %96 = vector.shape_cast %95 : vector<128xf32> to vector<1x128xf32>
    %97 = arith.addf %94, %96 : vector<1x128xf32>
    %cst_95 = arith.constant dense<0.000000e+00> : vector<128xf32>
    %98 = vector.multi_reduction <add>, %87, %cst_95 [0] : vector<8x128xf32> to vector<128xf32>
    %99 = vector.shape_cast %98 : vector<128xf32> to vector<1x128xf32>
    %100 = arith.addf %97, %99 : vector<1x128xf32>
    %c64_i32 = arith.constant 64 : i32
    %101 = tpu.dynamic_rotate %100 by %c64_i32 dim 1 : vector<1x128xf32>, i32 -> vector<1x128xf32>
    %102 = arith.addf %100, %101 : vector<1x128xf32>
    %c32_i32 = arith.constant 32 : i32
    %103 = tpu.dynamic_rotate %102 by %c32_i32 dim 1 : vector<1x128xf32>, i32 -> vector<1x128xf32>
    %104 = arith.addf %102, %103 : vector<1x128xf32>
    %c16_i32 = arith.constant 16 : i32
    %105 = tpu.dynamic_rotate %104 by %c16_i32 dim 1 : vector<1x128xf32>, i32 -> vector<1x128xf32>
    %106 = arith.addf %104, %105 : vector<1x128xf32>
    %c8_i32 = arith.constant 8 : i32
    %107 = tpu.dynamic_rotate %106 by %c8_i32 dim 1 : vector<1x128xf32>, i32 -> vector<1x128xf32>
    %108 = arith.addf %106, %107 : vector<1x128xf32>
    %cst_96 = arith.constant 0.001953125 : f32
    %109 = vector.broadcast %cst_96 : f32 to vector<1x128xf32>
    %110 = arith.mulf %108, %109 : vector<1x128xf32>
    %cst_97 = arith.constant 0.000000e+00 : f32
    %111 = vector.broadcast %cst_97 : f32 to vector<1x128xf32>
    %112 = vector.broadcast %110 : vector<1x128xf32> to vector<8x128xf32>
    %113 = arith.subf %21, %112 : vector<8x128xf32>
    %114 = arith.mulf %113, %113 : vector<8x128xf32>
    %cst_98 = arith.constant dense<0.000000e+00> : vector<128xf32>
    %115 = vector.multi_reduction <add>, %114, %cst_98 [0] : vector<8x128xf32> to vector<128xf32>
    %116 = vector.shape_cast %115 : vector<128xf32> to vector<1x128xf32>
    %117 = arith.addf %111, %116 : vector<1x128xf32>
    %118 = vector.broadcast %110 : vector<1x128xf32> to vector<8x128xf32>
    %119 = arith.subf %43, %118 : vector<8x128xf32>
    %120 = arith.mulf %119, %119 : vector<8x128xf32>
    %cst_99 = arith.constant dense<0.000000e+00> : vector<128xf32>
    %121 = vector.multi_reduction <add>, %120, %cst_99 [0] : vector<8x128xf32> to vector<128xf32>
    %122 = vector.shape_cast %121 : vector<128xf32> to vector<1x128xf32>
    %123 = arith.addf %117, %122 : vector<1x128xf32>
    %124 = vector.broadcast %110 : vector<1x128xf32> to vector<8x128xf32>
    %125 = arith.subf %65, %124 : vector<8x128xf32>
    %126 = arith.mulf %125, %125 : vector<8x128xf32>
    %cst_100 = arith.constant dense<0.000000e+00> : vector<128xf32>
    %127 = vector.multi_reduction <add>, %126, %cst_100 [0] : vector<8x128xf32> to vector<128xf32>
    %128 = vector.shape_cast %127 : vector<128xf32> to vector<1x128xf32>
    %129 = arith.addf %123, %128 : vector<1x128xf32>
    %130 = vector.broadcast %110 : vector<1x128xf32> to vector<8x128xf32>
    %131 = arith.subf %87, %130 : vector<8x128xf32>
    %132 = arith.mulf %131, %131 : vector<8x128xf32>
    %cst_101 = arith.constant dense<0.000000e+00> : vector<128xf32>
    %133 = vector.multi_reduction <add>, %132, %cst_101 [0] : vector<8x128xf32> to vector<128xf32>
    %134 = vector.shape_cast %133 : vector<128xf32> to vector<1x128xf32>
    %135 = arith.addf %129, %134 : vector<1x128xf32>
    %c0_102 = arith.constant 0 : index
    %c0_103 = arith.constant 0 : index
    %136 = vector.load %arg4[%c0_102, %c0_103] : memref<1x128xf32, #tpu.memory_space<vmem>>, vector<1x128xf32>
    %c64_i32_104 = arith.constant 64 : i32
    %137 = tpu.dynamic_rotate %135 by %c64_i32_104 dim 1 : vector<1x128xf32>, i32 -> vector<1x128xf32>
    %138 = arith.addf %135, %137 : vector<1x128xf32>
    %c32_i32_105 = arith.constant 32 : i32
    %139 = tpu.dynamic_rotate %138 by %c32_i32_105 dim 1 : vector<1x128xf32>, i32 -> vector<1x128xf32>
    %140 = arith.addf %138, %139 : vector<1x128xf32>
    %c16_i32_106 = arith.constant 16 : i32
    %141 = tpu.dynamic_rotate %140 by %c16_i32_106 dim 1 : vector<1x128xf32>, i32 -> vector<1x128xf32>
    %142 = arith.addf %140, %141 : vector<1x128xf32>
    %c8_i32_107 = arith.constant 8 : i32
    %143 = tpu.dynamic_rotate %142 by %c8_i32_107 dim 1 : vector<1x128xf32>, i32 -> vector<1x128xf32>
    %144 = arith.addf %142, %143 : vector<1x128xf32>
    %cst_108 = arith.constant 0.001953125 : f32
    %145 = vector.broadcast %cst_108 : f32 to vector<1x128xf32>
    %146 = arith.mulf %144, %145 : vector<1x128xf32>
    %cst_109 = arith.constant 9.99999974E-6 : f32
    %147 = vector.broadcast %cst_109 : f32 to vector<1x128xf32>
    %148 = arith.addf %146, %147 : vector<1x128xf32>
    %149 = math.rsqrt %148 : vector<1x128xf32>
    %150 = arith.mulf %136, %149 : vector<1x128xf32>
    %c0_110 = arith.constant 0 : index
    %c0_111 = arith.constant 0 : index
    %151 = vector.load %arg5[%c0_110, %c0_111] : memref<1x128xf32, #tpu.memory_space<vmem>>, vector<1x128xf32>
    %152 = vector.broadcast %110 : vector<1x128xf32> to vector<8x128xf32>
    %153 = arith.subf %21, %152 : vector<8x128xf32>
    %154 = vector.broadcast %150 : vector<1x128xf32> to vector<8x128xf32>
    %155 = arith.mulf %153, %154 : vector<8x128xf32>
    %156 = vector.broadcast %151 : vector<1x128xf32> to vector<8x128xf32>
    %157 = arith.addf %155, %156 : vector<8x128xf32>
    %cst_112 = arith.constant 0.000000e+00 : f32
    %158 = vector.broadcast %cst_112 : f32 to vector<8x128xf32>
    %159 = arith.maximumf %157, %158 : vector<8x128xf32>
    %160 = vector.broadcast %110 : vector<1x128xf32> to vector<8x128xf32>
    %161 = arith.subf %43, %160 : vector<8x128xf32>
    %162 = vector.broadcast %150 : vector<1x128xf32> to vector<8x128xf32>
    %163 = arith.mulf %161, %162 : vector<8x128xf32>
    %164 = vector.broadcast %151 : vector<1x128xf32> to vector<8x128xf32>
    %165 = arith.addf %163, %164 : vector<8x128xf32>
    %cst_113 = arith.constant 0.000000e+00 : f32
    %166 = vector.broadcast %cst_113 : f32 to vector<8x128xf32>
    %167 = arith.maximumf %165, %166 : vector<8x128xf32>
    %168 = vector.extract_strided_slice %159 {offsets = [0, 0], sizes = [8, 64], strides = [1, 1]} : vector<8x128xf32> to vector<8x64xf32>
    %169 = vector.extract_strided_slice %159 {offsets = [0, 64], sizes = [8, 64], strides = [1, 1]} : vector<8x128xf32> to vector<8x64xf32>
    %170 = arith.maximumf %168, %169 : vector<8x64xf32>
    %171 = vector.extract_strided_slice %167 {offsets = [0, 0], sizes = [8, 64], strides = [1, 1]} : vector<8x128xf32> to vector<8x64xf32>
    %172 = vector.extract_strided_slice %167 {offsets = [0, 64], sizes = [8, 64], strides = [1, 1]} : vector<8x128xf32> to vector<8x64xf32>
    %173 = arith.maximumf %171, %172 : vector<8x64xf32>
    %174 = arith.maximumf %170, %173 : vector<8x64xf32>
    %c0_114 = arith.constant 0 : index
    %c0_115 = arith.constant 0 : index
    %175 = vector.load %arg6[%c0_114, %c0_115] : memref<16x64xf32, #tpu.memory_space<vmem>>, vector<8x64xf32>
    tpu.vector_store %arg6[%c0_114, %c0_115], %174 {strides = array<i32>} : memref<16x64xf32, #tpu.memory_space<vmem>>, vector<8x64xf32>,
    %176 = vector.broadcast %110 : vector<1x128xf32> to vector<8x128xf32>
    %177 = arith.subf %65, %176 : vector<8x128xf32>
    %178 = vector.broadcast %150 : vector<1x128xf32> to vector<8x128xf32>
    %179 = arith.mulf %177, %178 : vector<8x128xf32>
    %180 = vector.broadcast %151 : vector<1x128xf32> to vector<8x128xf32>
    %181 = arith.addf %179, %180 : vector<8x128xf32>
    %cst_116 = arith.constant 0.000000e+00 : f32
    %182 = vector.broadcast %cst_116 : f32 to vector<8x128xf32>
    %183 = arith.maximumf %181, %182 : vector<8x128xf32>
    %184 = vector.broadcast %110 : vector<1x128xf32> to vector<8x128xf32>
    %185 = arith.subf %87, %184 : vector<8x128xf32>
    %186 = vector.broadcast %150 : vector<1x128xf32> to vector<8x128xf32>
    %187 = arith.mulf %185, %186 : vector<8x128xf32>
    %188 = vector.broadcast %151 : vector<1x128xf32> to vector<8x128xf32>
    %189 = arith.addf %187, %188 : vector<8x128xf32>
    %cst_117 = arith.constant 0.000000e+00 : f32
    %190 = vector.broadcast %cst_117 : f32 to vector<8x128xf32>
    %191 = arith.maximumf %189, %190 : vector<8x128xf32>
    %192 = vector.extract_strided_slice %183 {offsets = [0, 0], sizes = [8, 64], strides = [1, 1]} : vector<8x128xf32> to vector<8x64xf32>
    %193 = vector.extract_strided_slice %183 {offsets = [0, 64], sizes = [8, 64], strides = [1, 1]} : vector<8x128xf32> to vector<8x64xf32>
    %194 = arith.maximumf %192, %193 : vector<8x64xf32>
    %195 = vector.extract_strided_slice %191 {offsets = [0, 0], sizes = [8, 64], strides = [1, 1]} : vector<8x128xf32> to vector<8x64xf32>
    %196 = vector.extract_strided_slice %191 {offsets = [0, 64], sizes = [8, 64], strides = [1, 1]} : vector<8x128xf32> to vector<8x64xf32>
    %197 = arith.maximumf %195, %196 : vector<8x64xf32>
    %198 = arith.maximumf %194, %197 : vector<8x64xf32>
    %c8 = arith.constant 8 : index
    %c0_118 = arith.constant 0 : index
    %199 = vector.load %arg6[%c8, %c0_118] : memref<16x64xf32, #tpu.memory_space<vmem>>, vector<8x64xf32>
    tpu.vector_store %arg6[%c8, %c0_118], %198 {strides = array<i32>} : memref<16x64xf32, #tpu.memory_space<vmem>>, vector<8x64xf32>,
    return
  }
  func.func @transform_0(%arg0: i32) -> (i32, i32, i32) {
    %c0_i32 = arith.constant 0 : i32
    %c0_i32_0 = arith.constant 0 : i32
    %c0_i32_1 = arith.constant 0 : i32
    %c0_i32_2 = arith.constant 0 : i32
    return %c0_i32, %c0_i32_0, %c0_i32_1 : i32, i32, i32
  }
  func.func @transform_1(%arg0: i32) -> (i32, i32, i32) {
    %c0_i32 = arith.constant 0 : i32
    %c0_i32_0 = arith.constant 0 : i32
    %c0_i32_1 = arith.constant 0 : i32
    %c0_i32_2 = arith.constant 0 : i32
    return %c0_i32, %c0_i32_0, %c0_i32_1 : i32, i32, i32
  }
  func.func @transform_2(%arg0: i32) -> (i32, i32) {
    %c0_i32 = arith.constant 0 : i32
    %c0_i32_0 = arith.constant 0 : i32
    %c0_i32_1 = arith.constant 0 : i32
    return %c0_i32, %c0_i32_0 : i32, i32
  }
  func.func @transform_3(%arg0: i32) -> (i32, i32) {
    %c0_i32 = arith.constant 0 : i32
    %c0_i32_0 = arith.constant 0 : i32
    %c0_i32_1 = arith.constant 0 : i32
    return %c0_i32, %c0_i32_0 : i32, i32
  }
  func.func @transform_4(%arg0: i32) -> (i32, i32) {
    %c0_i32 = arith.constant 0 : i32
    %c0_i32_0 = arith.constant 0 : i32
    %c0_i32_1 = arith.constant 0 : i32
    return %c0_i32, %c0_i32_0 : i32, i32
  }
  func.func @transform_5(%arg0: i32) -> (i32, i32) {
    %c0_i32 = arith.constant 0 : i32
    %c0_i32_0 = arith.constant 0 : i32
    %c0_i32_1 = arith.constant 0 : i32
    return %c0_i32, %c0_i32_0 : i32, i32
  }
}

</mosaic_0001>

<llo_original>
// kernel: tile.18
$region0: #{tile.18}
  #allocation0 [shape = 's32[1]{0}', space=sflag, size = 0x4, scoped, tag = 'scoped memory for tile.18']
  %s0 = inlined_call_operand.vmem [shape: f32[8], index: 0, kind: input, shape index: {}]
  %s1 = inlined_call_operand.vmem [shape: f32[16,8], index: 1, kind: output, shape index: {}]
  // Predicated region
  $region2: #{tile.18} parent=0 // pred_check
    _
  $region3: #{tile.18} parent=0 // pred_check_branch
    %3 = sbr.rel (0) target = $region5
  $region4: #{tile.18} parent=0 // pred_region
    _
  $region5: #{tile.18} parent=0 // pred_fallthru
    _
  %v4 = vld [vmem:[%s0] ss:$0 sm:$0xff]
  %5 = vst [vmem:[%s1] sm:$0xff] %v4
  %s6 = scalar_lea.vmem %s1, 8
  %7 = vst [vmem:[%s6] sm:$0xff] %v4

// kernel: tile.19
$region0: #{tile.19}
  %s0 = inlined_call_operand.vmem [shape: f32[16,8], index: 0, kind: input, shape index: {}]
  %s1 = inlined_call_operand.vmem [shape: f32[1,128], index: 1, kind: output, shape index: {}]
  $region1: #{tile.19} parent=0
    #allocation0 [shape = 'u8[4096]{0}', space=vmem, size = 0x1000, scoped, tag = 'scoped mem for output reshape']
    %v2 = vld [vmem:[%s0] sm:$0x1]
    %vm3 = vcmask 64512
    %4 = vst.msk [vmem:[#allocation0] sm:$0x1] %vm3, %v2
    %s5 = scalar_lea.vmem %s0, 15
    %v6 = vld [vmem:[%s5] sm:$0x1]
    %7 = vrot.lane.b32.xlu0 %v6, 120
    %v8 = vpop.permute.xlu0 %7
    %vm9 = vcmask 1048512
    %10 = vst.msk [vmem:[#allocation0] sm:$0x1] %vm9, %v8
    %s11 = scalar_lea.vmem %s0, 14
    %v12 = vld [vmem:[%s11] sm:$0x1]
    %13 = vrot.lane.b32.xlu0 %v12, 112
    %v14 = vpop.permute.xlu0 %13
    %vm15 = vcmask 982912
    %16 = vst.msk [vmem:[#allocation0] sm:$0x1] %vm15, %v14
    %s17 = scalar_lea.vmem %s0, 13
    %v18 = vld [vmem:[%s17] sm:$0x1]
    %19 = vrot.lane.b32.xlu0 %v18, 104
    %v20 = vpop.permute.xlu0 %19
    %vm21 = vcmask 917312
    %22 = vst.msk [vmem:[#allocation0] sm:$0x1] %vm21, %v20
    %s23 = scalar_lea.vmem %s0, 12
    %v24 = vld [vmem:[%s23] sm:$0x1]
    %25 = vrot.lane.b32.xlu0 %v24, 96
    %v26 = vpop.permute.xlu0 %25
    %vm27 = vcmask 851712
    %28 = vst.msk [vmem:[#allocation0] sm:$0x1] %vm27, %v26
    %s29 = scalar_lea.vmem %s0, 11
    %v30 = vld [vmem:[%s29] sm:$0x1]
    %31 = vrot.lane.b32.xlu0 %v30, 88
    %v32 = vpop.permute.xlu0 %31
    %vm33 = vcmask 786112
    %34 = vst.msk [vmem:[#allocation0] sm:$0x1] %vm33, %v32
    %s35 = scalar_lea.vmem %s0, 10
    %v36 = vld [vmem:[%s35] sm:$0x1]
    %37 = vrot.lane.b32.xlu0 %v36, 80
    %v38 = vpop.permute.xlu0 %37
    %vm39 = vcmask 720512
    %40 = vst.msk [vmem:[#allocation0] sm:$0x1] %vm39, %v38
    %s41 = scalar_lea.vmem %s0, 9
    %v42 = vld [vmem:[%s41] sm:$0x1]
    %43 = vrot.lane.b32.xlu0 %v42, 72
    %v44 = vpop.permute.xlu0 %43
    %vm45 = vcmask 654912
    %46 = vst.msk [vmem:[#allocation0] sm:$0x1] %vm45, %v44
    %s47 = scalar_lea.vmem %s0, 8
    %v48 = vld [vmem:[%s47] sm:$0x1]
    %49 = vrot.lane.b32.xlu0 %v48, 64
    %v50 = vpop.permute.xlu0 %49
    %vm51 = vcmask 589312
    %52 = vst.msk [vmem:[#allocation0] sm:$0x1] %vm51, %v50
    %s53 = scalar_lea.vmem %s0, 7
    %v54 = vld [vmem:[%s53] sm:$0x1]
    %55 = vrot.lane.b32.xlu0 %v54, 56
    %v56 = vpop.permute.xlu0 %55
    %vm57 = vcmask 523712
    %58 = vst.msk [vmem:[#allocation0] sm:$0x1] %vm57, %v56
    %s59 = scalar_lea.vmem %s0, 6
    %v60 = vld [vmem:[%s59] sm:$0x1]
    %61 = vrot.lane.b32.xlu0 %v60, 48
    %v62 = vpop.permute.xlu0 %61
    %vm63 = vcmask 458112
    %64 = vst.msk [vmem:[#allocation0] sm:$0x1] %vm63, %v62
    %s65 = scalar_lea.vmem %s0, 5
    %v66 = vld [vmem:[%s65] sm:$0x1]
    %67 = vrot.lane.b32.xlu0 %v66, 40
    %v68 = vpop.permute.xlu0 %67
    %vm69 = vcmask 392512
    %70 = vst.msk [vmem:[#allocation0] sm:$0x1] %vm69, %v68
    %s71 = scalar_lea.vmem %s0, 4
    %v72 = vld [vmem:[%s71] sm:$0x1]
    %73 = vrot.lane.b32.xlu0 %v72, 32
    %v74 = vpop.permute.xlu0 %73
    %vm75 = vcmask 326912
    %76 = vst.msk [vmem:[#allocation0] sm:$0x1] %vm75, %v74
    %s77 = scalar_lea.vmem %s0, 3
    %v78 = vld [vmem:[%s77] sm:$0x1]
    %79 = vrot.lane.b32.xlu0 %v78, 24
    %v80 = vpop.permute.xlu0 %79
    %vm81 = vcmask 261312
    %82 = vst.msk [vmem:[#allocation0] sm:$0x1] %vm81, %v80
    %s83 = scalar_lea.vmem %s0, 2
    %v84 = vld [vmem:[%s83] sm:$0x1]
    %85 = vrot.lane.b32.xlu0 %v84, 16
    %v86 = vpop.permute.xlu0 %85
    %vm87 = vcmask 195712
    %88 = vst.msk [vmem:[#allocation0] sm:$0x1] %vm87, %v86
    %s89 = scalar_lea.vmem %s0, 1
    %v90 = vld [vmem:[%s89] sm:$0x1]
    %91 = vrot.lane.b32.xlu0 %v90, 8
    %v92 = vpop.permute.xlu0 %91
    %vm93 = vcmask 130112
    %94 = vst.msk [vmem:[#allocation0] sm:$0x1] %vm93, %v92
    %s96 = sshllo.u32 0, 1
    %v98 = vld [vmem:[#allocation0] sm:%s96]
    %s99 = sshllo.u32 0, 1
    %100 = vst [vmem:[%s1] sm:%s99] %v98

// kernel: encoder_block.1
$region0: #{encoder_block.1}
  #allocation0 [shape = 'u32[]', space=smem, size = 0x4, offset = 0x4, fixed_abs, tag = 'smem constant byte address 0x4 - core index']
  #allocation1 [shape = 'u32[144,128]{1,0:T(1,128)}', space=vmem, size = 0x12000, scoped, tag = 'internal scratch']
  %s0 = inlined_call_operand.vmem [shape: bf16[4,9,72], index: 0, kind: input, shape index: {}]
  %s1 = inlined_call_operand.vmem [shape: bf16[3,72,128], index: 1, kind: input, shape index: {}]
  %s2 = inlined_call_operand.vmem [shape: f32[1,128], index: 2, kind: input, shape index: {}]
  %s3 = inlined_call_operand.vmem [shape: f32[1,128], index: 3, kind: input, shape index: {}]
  %s4 = inlined_call_operand.vmem [shape: f32[1,128], index: 4, kind: input, shape index: {}]
  %s5 = inlined_call_operand.vmem [shape: f32[16,64], index: 5, kind: output, shape index: {}]
  %s6 = sld [smem:[#allocation0]]
  $region30: #{encoder_block.1} parent=0
    _
  %s8 = ssub.s32 1, %s6
  %s9 = scalar_select 0, %s8, %s6
  // Predicated region
  $region2: #{encoder_block.1} parent=0 // pred_check
    _
  $region3: #{encoder_block.1} parent=0 // pred_check_branch
    %11 = sbr.rel (0) target = $region5
  $region4: #{encoder_block.1} parent=0 // pred_region
    _
  $region5: #{encoder_block.1} parent=0 // pred_fallthru
    _
  // Predicated region
  $region6: #{encoder_block.1} parent=0 // pred_check
    _
  $region7: #{encoder_block.1} parent=0 // pred_check_branch
    %13 = sbr.rel (0) target = $region9
  $region8: #{encoder_block.1} parent=0 // pred_region
    _
  $region9: #{encoder_block.1} parent=0 // pred_fallthru
    _
  // Predicated region
  $region10: #{encoder_block.1} parent=0 // pred_check
    _
  $region11: #{encoder_block.1} parent=0 // pred_check_branch
    %15 = sbr.rel (0) target = $region13
  $region12: #{encoder_block.1} parent=0 // pred_region
    _
  $region13: #{encoder_block.1} parent=0 // pred_fallthru
    _
  // Predicated region
  $region14: #{encoder_block.1} parent=0 // pred_check
    _
  $region15: #{encoder_block.1} parent=0 // pred_check_branch
    %17 = sbr.rel (0) target = $region17
  $region16: #{encoder_block.1} parent=0 // pred_region
    _
  $region17: #{encoder_block.1} parent=0 // pred_fallthru
    _
  // Predicated region
  $region18: #{encoder_block.1} parent=0 // pred_check
    _
  $region19: #{encoder_block.1} parent=0 // pred_check_branch
    %19 = sbr.rel (0) target = $region21
  $region20: #{encoder_block.1} parent=0 // pred_region
    _
  $region21: #{encoder_block.1} parent=0 // pred_fallthru
    _
  %v21 = vld [vmem:[%s0] sm:$0xf]
  %v22 = vld [vmem:[%s1] sm:$0xf]
  %v23 = vld [vmem:[%s1 + $0x4] sm:$0xf]
  %v24 = vld [vmem:[%s1 + $0x8] sm:$0xf]
  %v25 = vld [vmem:[%s1 + $0xc] sm:$0xf]
  %v26 = vld [vmem:[%s1 + $0x10] sm:$0xf]
  %v27 = vld [vmem:[%s1 + $0x14] sm:$0xf]
  %v28 = vld [vmem:[%s1 + $0x18] sm:$0xf]
  %v29 = vld [vmem:[%s1 + $0x1c] sm:$0xf]
  %v30 = vld [vmem:[%s1 + $0x20] sm:$0xf]
  %s31 = scalar_lea.vmem %s0, 8
  %v32 = vld [vmem:[%s31] sm:$0xf]
  %s33 = scalar_lea.vmem %s1, 36
  %v34 = vld [vmem:[%s33] sm:$0xf]
  %v35 = vld [vmem:[%s33 + $0x4] sm:$0xf]
  %v36 = vld [vmem:[%s33 + $0x8] sm:$0xf]
  %v37 = vld [vmem:[%s33 + $0xc] sm:$0xf]
  %v38 = vld [vmem:[%s33 + $0x10] sm:$0xf]
  %v39 = vld [vmem:[%s33 + $0x14] sm:$0xf]
  %v40 = vld [vmem:[%s33 + $0x18] sm:$0xf]
  %v41 = vld [vmem:[%s33 + $0x1c] sm:$0xf]
  %v42 = vld [vmem:[%s33 + $0x20] sm:$0xf]
  %v52 = vunpack.c.l.b16 %v34
  %v53 = vunpack.c.l.b16 %v35
  %v54 = vunpack.c.l.b16 %v36
  %v55 = vunpack.c.l.b16 %v37
  %v56 = vunpack.c.l.b16 %v38
  %v57 = vunpack.c.l.b16 %v39
  %v58 = vunpack.c.l.b16 %v40
  %v59 = vunpack.c.l.b16 %v41
  %v60 = vunpack.c.l.b16 %v42
  %v61 = vpack.c.b16 %v53, %v52
  %v62 = vpack.c.b16 %v55, %v54
  %v63 = vpack.c.b16 %v57, %v56
  %v64 = vpack.c.b16 %v59, %v58
  %v65 = vpack.c.b16 %v60, %v60
  %vm70 = vcmask 588800
  %v72 = vsel %vm70, %v32, 0
  %vm74 = vcmask 1043456
  %v76 = vsel %vm74, %v65, 0
  %78 = vmatprep.subr.bf16.mxu0 0
  %79 = vmatpush1.bf16.msra.mxu0 %v61
  %80 = vmatprep.subr.bf16.mxu0 0
  %81 = vmatpush1.bf16.msra.mxu0 %v62
  %82 = vmatprep.subr.bf16.mxu0 0
  %83 = vmatpush1.bf16.msra.mxu0 %v63
  %84 = vmatprep.subr.bf16.mxu0 0
  %85 = vmatpush1.bf16.msra.mxu0 %v64
  %86 = vmatprep.subr.bf16.mxu0 0
  %87 = vmatpush1.bf16.msra.mxu0 %v76
  %88 = vmatprep.subr.bf16.mxu0 0
  %89 = vmatpush1.bf16.msra.mxu0 0
  %90 = vmatprep.subr.bf16.mxu0 0
  %91 = vmatpush1.bf16.msra.mxu0 0
  %92 = vmatprep.subr.bf16.mxu0 0
  %93 = vmatpush1.bf16.msra.mxu0 0
  %94 = vmatprep.subr.bf16.mxu0 0
  %95 = vmatpush1.bf16.msra.mxu0 0
  %96 = vmatprep.subr.bf16.mxu0 0
  %97 = vmatpush1.bf16.msra.mxu0 0
  %98 = vmatprep.subr.bf16.mxu0 0
  %99 = vmatpush1.bf16.msra.mxu0 0
  %100 = vmatprep.subr.bf16.mxu0 0
  %101 = vmatpush1.bf16.msra.mxu0 0
  %102 = vmatprep.subr.bf16.mxu0 0
  %103 = vmatpush1.bf16.msra.mxu0 0
  %104 = vmatprep.subr.bf16.mxu0 0
  %105 = vmatpush1.bf16.msra.mxu0 0
  %106 = vmatprep.subr.bf16.mxu0 0
  %107 = vmatpush1.bf16.msra.mxu0 0
  %108 = vmatprep.subr.bf16.mxu0 0
  %109 = vmatpush1.bf16.msra.mxu0 0
  %110 = vmatprep.mubr.bf16.mxu0 0
  %111 = vmatmul.mubr.bf16.gmra.mrb[0].mxu0 %v72
  %v112 = vpop.f32.mrb[0].mxu0
  %v113 = vadd.f32 0.0, %v112
  %v114 = vpop.f32.mrb[0].mxu0
  %v115 = vpop.f32.mrb[0].mxu0
  %v116 = vpop.f32.mrb[0].mxu0
  %117 = vdwg.mxu0
  %v127 = vunpack.c.l.b16 %v22
  %v128 = vunpack.c.l.b16 %v23
  %v129 = vunpack.c.l.b16 %v24
  %v130 = vunpack.c.l.b16 %v25
  %v131 = vunpack.c.l.b16 %v26
  %v132 = vunpack.c.l.b16 %v27
  %v133 = vunpack.c.l.b16 %v28
  %v134 = vunpack.c.l.b16 %v29
  %v135 = vunpack.c.l.b16 %v30
  %v136 = vpack.c.b16 %v128, %v127
  %v137 = vpack.c.b16 %v130, %v129
  %v138 = vpack.c.b16 %v132, %v131
  %v139 = vpack.c.b16 %v134, %v133
  %v140 = vpack.c.b16 %v135, %v135
  %v146 = vsel %vm70, %v21, 0
  %v149 = vsel %vm74, %v140, 0
  %151 = vmatprep.subr.bf16.mxu0 0
  %152 = vmatpush1.bf16.msra.mxu0 %v136
  %153 = vmatprep.subr.bf16.mxu0 0
  %154 = vmatpush1.bf16.msra.mxu0 %v137
  %155 = vmatprep.subr.bf16.mxu0 0
  %156 = vmatpush1.bf16.msra.mxu0 %v138
  %157 = vmatprep.subr.bf16.mxu0 0
  %158 = vmatpush1.bf16.msra.mxu0 %v139
  %159 = vmatprep.subr.bf16.mxu0 0
  %160 = vmatpush1.bf16.msra.mxu0 %v149
  %161 = vmatprep.subr.bf16.mxu0 0
  %162 = vmatpush1.bf16.msra.mxu0 0
  %163 = vmatprep.subr.bf16.mxu0 0
  %164 = vmatpush1.bf16.msra.mxu0 0
  %165 = vmatprep.subr.bf16.mxu0 0
  %166 = vmatpush1.bf16.msra.mxu0 0
  %167 = vmatprep.subr.bf16.mxu0 0
  %168 = vmatpush1.bf16.msra.mxu0 0
  %169 = vmatprep.subr.bf16.mxu0 0
  %170 = vmatpush1.bf16.msra.mxu0 0
  %171 = vmatprep.subr.bf16.mxu0 0
  %172 = vmatpush1.bf16.msra.mxu0 0
  %173 = vmatprep.subr.bf16.mxu0 0
  %174 = vmatpush1.bf16.msra.mxu0 0
  %175 = vmatprep.subr.bf16.mxu0 0
  %176 = vmatpush1.bf16.msra.mxu0 0
  %177 = vmatprep.subr.bf16.mxu0 0
  %178 = vmatpush1.bf16.msra.mxu0 0
  %179 = vmatprep.subr.bf16.mxu0 0
  %180 = vmatpush1.bf16.msra.mxu0 0
  %181 = vmatprep.subr.bf16.mxu0 0
  %182 = vmatpush1.bf16.msra.mxu0 0
  %183 = vmatprep.mubr.bf16.mxu0 0
  %184 = vmatmul.mubr.bf16.gmra.mrb[0].mxu0 %v146
  %v185 = vpop.f32.mrb[0].mxu0
  %v186 = vadd.f32 %v113, %v185
  %v187 = vpop.f32.mrb[0].mxu0
  %v188 = vpop.f32.mrb[0].mxu0
  %v189 = vpop.f32.mrb[0].mxu0
  %190 = vdwg.mxu0
  %v191 = vld [vmem:[%s0] sm:$0xf]
  %v192 = vld [vmem:[%s0 + $0x4] sm:$0x1]
  %s193 = scalar_lea.vmem %s1, 72
  %v194 = vld [vmem:[%s193] sm:$0xf]
  %v195 = vld [vmem:[%s193 + $0x4] sm:$0xf]
  %v196 = vld [vmem:[%s193 + $0x8] sm:$0xf]
  %v197 = vld [vmem:[%s193 + $0xc] sm:$0xf]
  %v198 = vld [vmem:[%s193 + $0x10] sm:$0xf]
  %v199 = vld [vmem:[%s193 + $0x14] sm:$0xf]
  %v200 = vld [vmem:[%s193 + $0x18] sm:$0xf]
  %v201 = vld [vmem:[%s193 + $0x1c] sm:$0xf]
  %v202 = vld [vmem:[%s193 + $0x20] sm:$0xf]
  %v205 = vunpack.c.l.b16 %v191
  %v206 = vunpack.c.l.b16 %v192
  %v207 = vpack.c.b16 %v206, %v205
  %v209 = vshrl.u32 %v207, 16
  %v211 = vshll.u32 %v207, 16
  %v213 = vrot.slane %v211, 1
  %v214 = vor.u32 %v209, %v213
  %v224 = vunpack.c.l.b16 %v194
  %v225 = vunpack.c.l.b16 %v195
  %v226 = vunpack.c.l.b16 %v196
  %v227 = vunpack.c.l.b16 %v197
  %v228 = vunpack.c.l.b16 %v198
  %v229 = vunpack.c.l.b16 %v199
  %v230 = vunpack.c.l.b16 %v200
  %v231 = vunpack.c.l.b16 %v201
  %v232 = vunpack.c.l.b16 %v202
  %v233 = vpack.c.b16 %v225, %v224
  %v234 = vpack.c.b16 %v227, %v226
  %v235 = vpack.c.b16 %v229, %v228
  %v236 = vpack.c.b16 %v231, %v230
  %v237 = vpack.c.b16 %v232, %v232
  %v243 = vsel %vm70, %v214, 0
  %v246 = vsel %vm74, %v237, 0
  %248 = vmatprep.subr.bf16.mxu0 0
  %249 = vmatpush1.bf16.msra.mxu0 %v233
  %250 = vmatprep.subr.bf16.mxu0 0
  %251 = vmatpush1.bf16.msra.mxu0 %v234
  %252 = vmatprep.subr.bf16.mxu0 0
  %253 = vmatpush1.bf16.msra.mxu0 %v235
  %254 = vmatprep.subr.bf16.mxu0 0
  %255 = vmatpush1.bf16.msra.mxu0 %v236
  %256 = vmatprep.subr.bf16.mxu0 0
  %257 = vmatpush1.bf16.msra.mxu0 %v246
  %258 = vmatprep.subr.bf16.mxu0 0
  %259 = vmatpush1.bf16.msra.mxu0 0
  %260 = vmatprep.subr.bf16.mxu0 0
  %261 = vmatpush1.bf16.msra.mxu0 0
  %262 = vmatprep.subr.bf16.mxu0 0
  %263 = vmatpush1.bf16.msra.mxu0 0
  %264 = vmatprep.subr.bf16.mxu0 0
  %265 = vmatpush1.bf16.msra.mxu0 0
  %266 = vmatprep.subr.bf16.mxu0 0
  %267 = vmatpush1.bf16.msra.mxu0 0
  %268 = vmatprep.subr.bf16.mxu0 0
  %269 = vmatpush1.bf16.msra.mxu0 0
  %270 = vmatprep.subr.bf16.mxu0 0
  %271 = vmatpush1.bf16.msra.mxu0 0
  %272 = vmatprep.subr.bf16.mxu0 0
  %273 = vmatpush1.bf16.msra.mxu0 0
  %274 = vmatprep.subr.bf16.mxu0 0
  %275 = vmatpush1.bf16.msra.mxu0 0
  %276 = vmatprep.subr.bf16.mxu0 0
  %277 = vmatpush1.bf16.msra.mxu0 0
  %278 = vmatprep.subr.bf16.mxu0 0
  %279 = vmatpush1.bf16.msra.mxu0 0
  %280 = vmatprep.mubr.bf16.mxu0 0
  %281 = vmatmul.mubr.bf16.gmra.mrb[0].mxu0 %v243
  %v282 = vpop.f32.mrb[0].mxu0
  %v283 = vadd.f32 0.0, %v282
  %v284 = vpop.f32.mrb[0].mxu0
  %v285 = vpop.f32.mrb[0].mxu0
  %v286 = vpop.f32.mrb[0].mxu0
  %287 = vdwg.mxu0
  %v288 = vadd.f32 %v186, %v283
  %v289 = vld [vmem:[%s2] sm:$0x1]
  %v291 = vlaneseq
  %v292 = vshrl.u32 %v291, 7
  %v293 = vsub.s32 0, %v292
  %v294 = vrot.slane %v289, %v293
  %v296 = vadd.f32 %v288, %v294
  %297 = vmatprep.subr.bf16.mxu0 0
  %298 = vmatpush1.bf16.msra.mxu0 %v61
  %299 = vmatprep.subr.bf16.mxu0 0
  %300 = vmatpush1.bf16.msra.mxu0 %v62
  %301 = vmatprep.subr.bf16.mxu0 0
  %302 = vmatpush1.bf16.msra.mxu0 %v63
  %303 = vmatprep.subr.bf16.mxu0 0
  %304 = vmatpush1.bf16.msra.mxu0 %v64
  %305 = vmatprep.subr.bf16.mxu0 0
  %306 = vmatpush1.bf16.msra.mxu0 %v76
  %307 = vmatprep.subr.bf16.mxu0 0
  %308 = vmatpush1.bf16.msra.mxu0 0
  %309 = vmatprep.subr.bf16.mxu0 0
  %310 = vmatpush1.bf16.msra.mxu0 0
  %311 = vmatprep.subr.bf16.mxu0 0
  %312 = vmatpush1.bf16.msra.mxu0 0
  %313 = vmatprep.subr.bf16.mxu0 0
  %314 = vmatpush1.bf16.msra.mxu0 0
  %315 = vmatprep.subr.bf16.mxu0 0
  %316 = vmatpush1.bf16.msra.mxu0 0
  %317 = vmatprep.subr.bf16.mxu0 0
  %318 = vmatpush1.bf16.msra.mxu0 0
  %319 = vmatprep.subr.bf16.mxu0 0
  %320 = vmatpush1.bf16.msra.mxu0 0
  %321 = vmatprep.subr.bf16.mxu0 0
  %322 = vmatpush1.bf16.msra.mxu0 0
  %323 = vmatprep.subr.bf16.mxu0 0
  %324 = vmatpush1.bf16.msra.mxu0 0
  %325 = vmatprep.subr.bf16.mxu0 0
  %326 = vmatpush1.bf16.msra.mxu0 0
  %327 = vmatprep.subr.bf16.mxu0 0
  %328 = vmatpush1.bf16.msra.mxu0 0
  %329 = vmatprep.mubr.bf16.mxu0 0
  %330 = vmatmul.mubr.bf16.gmra.mrb[0].mxu0 %v243
  %v331 = vpop.f32.mrb[0].mxu0
  %v332 = vadd.f32 0.0, %v331
  %v333 = vpop.f32.mrb[0].mxu0
  %v334 = vpop.f32.mrb[0].mxu0
  %v335 = vpop.f32.mrb[0].mxu0
  %336 = vdwg.mxu0
  %337 = vmatprep.subr.bf16.mxu0 0
  %338 = vmatpush1.bf16.msra.mxu0 %v136
  %339 = vmatprep.subr.bf16.mxu0 0
  %340 = vmatpush1.bf16.msra.mxu0 %v137
  %341 = vmatprep.subr.bf16.mxu0 0
  %342 = vmatpush1.bf16.msra.mxu0 %v138
  %343 = vmatprep.subr.bf16.mxu0 0
  %344 = vmatpush1.bf16.msra.mxu0 %v139
  %345 = vmatprep.subr.bf16.mxu0 0
  %346 = vmatpush1.bf16.msra.mxu0 %v149
  %347 = vmatprep.subr.bf16.mxu0 0
  %348 = vmatpush1.bf16.msra.mxu0 0
  %349 = vmatprep.subr.bf16.mxu0 0
  %350 = vmatpush1.bf16.msra.mxu0 0
  %351 = vmatprep.subr.bf16.mxu0 0
  %352 = vmatpush1.bf16.msra.mxu0 0
  %353 = vmatprep.subr.bf16.mxu0 0
  %354 = vmatpush1.bf16.msra.mxu0 0
  %355 = vmatprep.subr.bf16.mxu0 0
  %356 = vmatpush1.bf16.msra.mxu0 0
  %357 = vmatprep.subr.bf16.mxu0 0
  %358 = vmatpush1.bf16.msra.mxu0 0
  %359 = vmatprep.subr.bf16.mxu0 0
  %360 = vmatpush1.bf16.msra.mxu0 0
  %361 = vmatprep.subr.bf16.mxu0 0
  %362 = vmatpush1.bf16.msra.mxu0 0
  %363 = vmatprep.subr.bf16.mxu0 0
  %364 = vmatpush1.bf16.msra.mxu0 0
  %365 = vmatprep.subr.bf16.mxu0 0
  %366 = vmatpush1.bf16.msra.mxu0 0
  %367 = vmatprep.subr.bf16.mxu0 0
  %368 = vmatpush1.bf16.msra.mxu0 0
  %369 = vmatprep.mubr.bf16.mxu0 0
  %370 = vmatmul.mubr.bf16.gmra.mrb[0].mxu0 %v72
  %v371 = vpop.f32.mrb[0].mxu0
  %v372 = vadd.f32 %v332, %v371
  %v373 = vpop.f32.mrb[0].mxu0
  %v374 = vpop.f32.mrb[0].mxu0
  %v375 = vpop.f32.mrb[0].mxu0
  %376 = vdwg.mxu0
  %v377 = vld [vmem:[%s31] sm:$0xf]
  %v378 = vld [vmem:[%s31 + $0x4] sm:$0x1]
  %v381 = vunpack.c.l.b16 %v377
  %v382 = vunpack.c.l.b16 %v378
  %v383 = vpack.c.b16 %v382, %v381
  %v385 = vshrl.u32 %v383, 16
  %v387 = vshll.u32 %v383, 16
  %v389 = vrot.slane %v387, 1
  %v390 = vor.u32 %v385, %v389
  %v392 = vsel %vm70, %v390, 0
  %394 = vmatprep.subr.bf16.mxu0 0
  %395 = vmatpush1.bf16.msra.mxu0 %v233
  %396 = vmatprep.subr.bf16.mxu0 0
  %397 = vmatpush1.bf16.msra.mxu0 %v234
  %398 = vmatprep.subr.bf16.mxu0 0
  %399 = vmatpush1.bf16.msra.mxu0 %v235
  %400 = vmatprep.subr.bf16.mxu0 0
  %401 = vmatpush1.bf16.msra.mxu0 %v236
  %402 = vmatprep.subr.bf16.mxu0 0
  %403 = vmatpush1.bf16.msra.mxu0 %v246
  %404 = vmatprep.subr.bf16.mxu0 0
  %405 = vmatpush1.bf16.msra.mxu0 0
  %406 = vmatprep.subr.bf16.mxu0 0
  %407 = vmatpush1.bf16.msra.mxu0 0
  %408 = vmatprep.subr.bf16.mxu0 0
  %409 = vmatpush1.bf16.msra.mxu0 0
  %410 = vmatprep.subr.bf16.mxu0 0
  %411 = vmatpush1.bf16.msra.mxu0 0
  %412 = vmatprep.subr.bf16.mxu0 0
  %413 = vmatpush1.bf16.msra.mxu0 0
  %414 = vmatprep.subr.bf16.mxu0 0
  %415 = vmatpush1.bf16.msra.mxu0 0
  %416 = vmatprep.subr.bf16.mxu0 0
  %417 = vmatpush1.bf16.msra.mxu0 0
  %418 = vmatprep.subr.bf16.mxu0 0
  %419 = vmatpush1.bf16.msra.mxu0 0
  %420 = vmatprep.subr.bf16.mxu0 0
  %421 = vmatpush1.bf16.msra.mxu0 0
  %422 = vmatprep.subr.bf16.mxu0 0
  %423 = vmatpush1.bf16.msra.mxu0 0
  %424 = vmatprep.subr.bf16.mxu0 0
  %425 = vmatpush1.bf16.msra.mxu0 0
  %426 = vmatprep.mubr.bf16.mxu0 0
  %427 = vmatmul.mubr.bf16.gmra.mrb[0].mxu0 %v392
  %v428 = vpop.f32.mrb[0].mxu0
  %v429 = vadd.f32 0.0, %v428
  %v430 = vpop.f32.mrb[0].mxu0
  %v431 = vpop.f32.mrb[0].mxu0
  %v432 = vpop.f32.mrb[0].mxu0
  %433 = vdwg.mxu0
  %v434 = vadd.f32 %v372, %v429
  %v435 = vadd.f32 %v434, %v294
  %s436 = scalar_lea.vmem %s0, 16
  %v437 = vld [vmem:[%s436] sm:$0xf]
  %s438 = scalar_lea.vmem %s0, 24
  %v439 = vld [vmem:[%s438] sm:$0xf]
  %v441 = vsel %vm70, %v439, 0
  %443 = vmatprep.subr.bf16.mxu0 0
  %444 = vmatpush1.bf16.msra.mxu0 %v61
  %445 = vmatprep.subr.bf16.mxu0 0
  %446 = vmatpush1.bf16.msra.mxu0 %v62
  %447 = vmatprep.subr.bf16.mxu0 0
  %448 = vmatpush1.bf16.msra.mxu0 %v63
  %449 = vmatprep.subr.bf16.mxu0 0
  %450 = vmatpush1.bf16.msra.mxu0 %v64
  %451 = vmatprep.subr.bf16.mxu0 0
  %452 = vmatpush1.bf16.msra.mxu0 %v76
  %453 = vmatprep.subr.bf16.mxu0 0
  %454 = vmatpush1.bf16.msra.mxu0 0
  %455 = vmatprep.subr.bf16.mxu0 0
  %456 = vmatpush1.bf16.msra.mxu0 0
  %457 = vmatprep.subr.bf16.mxu0 0
  %458 = vmatpush1.bf16.msra.mxu0 0
  %459 = vmatprep.subr.bf16.mxu0 0
  %460 = vmatpush1.bf16.msra.mxu0 0
  %461 = vmatprep.subr.bf16.mxu0 0
  %462 = vmatpush1.bf16.msra.mxu0 0
  %463 = vmatprep.subr.bf16.mxu0 0
  %464 = vmatpush1.bf16.msra.mxu0 0
  %465 = vmatprep.subr.bf16.mxu0 0
  %466 = vmatpush1.bf16.msra.mxu0 0
  %467 = vmatprep.subr.bf16.mxu0 0
  %468 = vmatpush1.bf16.msra.mxu0 0
  %469 = vmatprep.subr.bf16.mxu0 0
  %470 = vmatpush1.bf16.msra.mxu0 0
  %471 = vmatprep.subr.bf16.mxu0 0
  %472 = vmatpush1.bf16.msra.mxu0 0
  %473 = vmatprep.subr.bf16.mxu0 0
  %474 = vmatpush1.bf16.msra.mxu0 0
  %475 = vmatprep.mubr.bf16.mxu0 0
  %476 = vmatmul.mubr.bf16.gmra.mrb[0].mxu0 %v441
  %v477 = vpop.f32.mrb[0].mxu0
  %v478 = vadd.f32 0.0, %v477
  %v479 = vpop.f32.mrb[0].mxu0
  %v480 = vpop.f32.mrb[0].mxu0
  %v481 = vpop.f32.mrb[0].mxu0
  %482 = vdwg.mxu0
  %v484 = vsel %vm70, %v437, 0
  %486 = vmatprep.subr.bf16.mxu0 0
  %487 = vmatpush1.bf16.msra.mxu0 %v136
  %488 = vmatprep.subr.bf16.mxu0 0
  %489 = vmatpush1.bf16.msra.mxu0 %v137
  %490 = vmatprep.subr.bf16.mxu0 0
  %491 = vmatpush1.bf16.msra.mxu0 %v138
  %492 = vmatprep.subr.bf16.mxu0 0
  %493 = vmatpush1.bf16.msra.mxu0 %v139
  %494 = vmatprep.subr.bf16.mxu0 0
  %495 = vmatpush1.bf16.msra.mxu0 %v149
  %496 = vmatprep.subr.bf16.mxu0 0
  %497 = vmatpush1.bf16.msra.mxu0 0
  %498 = vmatprep.subr.bf16.mxu0 0
  %499 = vmatpush1.bf16.msra.mxu0 0
  %500 = vmatprep.subr.bf16.mxu0 0
  %501 = vmatpush1.bf16.msra.mxu0 0
  %502 = vmatprep.subr.bf16.mxu0 0
  %503 = vmatpush1.bf16.msra.mxu0 0
  %504 = vmatprep.subr.bf16.mxu0 0
  %505 = vmatpush1.bf16.msra.mxu0 0
  %506 = vmatprep.subr.bf16.mxu0 0
  %507 = vmatpush1.bf16.msra.mxu0 0
  %508 = vmatprep.subr.bf16.mxu0 0
  %509 = vmatpush1.bf16.msra.mxu0 0
  %510 = vmatprep.subr.bf16.mxu0 0
  %511 = vmatpush1.bf16.msra.mxu0 0
  %512 = vmatprep.subr.bf16.mxu0 0
  %513 = vmatpush1.bf16.msra.mxu0 0
  %514 = vmatprep.subr.bf16.mxu0 0
  %515 = vmatpush1.bf16.msra.mxu0 0
  %516 = vmatprep.subr.bf16.mxu0 0
  %517 = vmatpush1.bf16.msra.mxu0 0
  %518 = vmatprep.mubr.bf16.mxu0 0
  %519 = vmatmul.mubr.bf16.gmra.mrb[0].mxu0 %v484
  %v520 = vpop.f32.mrb[0].mxu0
  %v521 = vadd.f32 %v478, %v520
  %v522 = vpop.f32.mrb[0].mxu0
  %v523 = vpop.f32.mrb[0].mxu0
  %v524 = vpop.f32.mrb[0].mxu0
  %525 = vdwg.mxu0
  %v526 = vld [vmem:[%s436] sm:$0xf]
  %v527 = vld [vmem:[%s436 + $0x4] sm:$0x1]
  %v530 = vunpack.c.l.b16 %v526
  %v531 = vunpack.c.l.b16 %v527
  %v532 = vpack.c.b16 %v531, %v530
  %v534 = vshrl.u32 %v532, 16
  %v536 = vshll.u32 %v532, 16
  %v538 = vrot.slane %v536, 1
  %v539 = vor.u32 %v534, %v538
  %v541 = vsel %vm70, %v539, 0
  %543 = vmatprep.subr.bf16.mxu0 0
  %544 = vmatpush1.bf16.msra.mxu0 %v233
  %545 = vmatprep.subr.bf16.mxu0 0
  %546 = vmatpush1.bf16.msra.mxu0 %v234
  %547 = vmatprep.subr.bf16.mxu0 0
  %548 = vmatpush1.bf16.msra.mxu0 %v235
  %549 = vmatprep.subr.bf16.mxu0 0
  %550 = vmatpush1.bf16.msra.mxu0 %v236
  %551 = vmatprep.subr.bf16.mxu0 0
  %552 = vmatpush1.bf16.msra.mxu0 %v246
  %553 = vmatprep.subr.bf16.mxu0 0
  %554 = vmatpush1.bf16.msra.mxu0 0
  %555 = vmatprep.subr.bf16.mxu0 0
  %556 = vmatpush1.bf16.msra.mxu0 0
  %557 = vmatprep.subr.bf16.mxu0 0
  %558 = vmatpush1.bf16.msra.mxu0 0
  %559 = vmatprep.subr.bf16.mxu0 0
  %560 = vmatpush1.bf16.msra.mxu0 0
  %561 = vmatprep.subr.bf16.mxu0 0
  %562 = vmatpush1.bf16.msra.mxu0 0
  %563 = vmatprep.subr.bf16.mxu0 0
  %564 = vmatpush1.bf16.msra.mxu0 0
  %565 = vmatprep.subr.bf16.mxu0 0
  %566 = vmatpush1.bf16.msra.mxu0 0
  %567 = vmatprep.subr.bf16.mxu0 0
  %568 = vmatpush1.bf16.msra.mxu0 0
  %569 = vmatprep.subr.bf16.mxu0 0
  %570 = vmatpush1.bf16.msra.mxu0 0
  %571 = vmatprep.subr.bf16.mxu0 0
  %572 = vmatpush1.bf16.msra.mxu0 0
  %573 = vmatprep.subr.bf16.mxu0 0
  %574 = vmatpush1.bf16.msra.mxu0 0
  %575 = vmatprep.mubr.bf16.mxu0 0
  %576 = vmatmul.mubr.bf16.gmra.mrb[0].mxu0 %v541
  %v577 = vpop.f32.mrb[0].mxu0
  %v578 = vadd.f32 0.0, %v577
  %v579 = vpop.f32.mrb[0].mxu0
  %v580 = vpop.f32.mrb[0].mxu0
  %v581 = vpop.f32.mrb[0].mxu0
  %582 = vdwg.mxu0
  %v583 = vadd.f32 %v521, %v578
  %v584 = vadd.f32 %v583, %v294
  %585 = vmatprep.subr.bf16.mxu0 0
  %586 = vmatpush1.bf16.msra.mxu0 %v61
  %587 = vmatprep.subr.bf16.mxu0 0
  %588 = vmatpush1.bf16.msra.mxu0 %v62
  %589 = vmatprep.subr.bf16.mxu0 0
  %590 = vmatpush1.bf16.msra.mxu0 %v63
  %591 = vmatprep.subr.bf16.mxu0 0
  %592 = vmatpush1.bf16.msra.mxu0 %v64
  %593 = vmatprep.subr.bf16.mxu0 0
  %594 = vmatpush1.bf16.msra.mxu0 %v76
  %595 = vmatprep.subr.bf16.mxu0 0
  %596 = vmatpush1.bf16.msra.mxu0 0
  %597 = vmatprep.subr.bf16.mxu0 0
  %598 = vmatpush1.bf16.msra.mxu0 0
  %599 = vmatprep.subr.bf16.mxu0 0
  %600 = vmatpush1.bf16.msra.mxu0 0
  %601 = vmatprep.subr.bf16.mxu0 0
  %602 = vmatpush1.bf16.msra.mxu0 0
  %603 = vmatprep.subr.bf16.mxu0 0
  %604 = vmatpush1.bf16.msra.mxu0 0
  %605 = vmatprep.subr.bf16.mxu0 0
  %606 = vmatpush1.bf16.msra.mxu0 0
  %607 = vmatprep.subr.bf16.mxu0 0
  %608 = vmatpush1.bf16.msra.mxu0 0
  %609 = vmatprep.subr.bf16.mxu0 0
  %610 = vmatpush1.bf16.msra.mxu0 0
  %611 = vmatprep.subr.bf16.mxu0 0
  %612 = vmatpush1.bf16.msra.mxu0 0
  %613 = vmatprep.subr.bf16.mxu0 0
  %614 = vmatpush1.bf16.msra.mxu0 0
  %615 = vmatprep.subr.bf16.mxu0 0
  %616 = vmatpush1.bf16.msra.mxu0 0
  %617 = vmatprep.mubr.bf16.mxu0 0
  %618 = vmatmul.mubr.bf16.gmra.mrb[0].mxu0 %v541
  %v619 = vpop.f32.mrb[0].mxu0
  %v620 = vadd.f32 0.0, %v619
  %v621 = vpop.f32.mrb[0].mxu0
  %v622 = vpop.f32.mrb[0].mxu0
  %v623 = vpop.f32.mrb[0].mxu0
  %624 = vdwg.mxu0
  %625 = vmatprep.subr.bf16.mxu0 0
  %626 = vmatpush1.bf16.msra.mxu0 %v136
  %627 = vmatprep.subr.bf16.mxu0 0
  %628 = vmatpush1.bf16.msra.mxu0 %v137
  %629 = vmatprep.subr.bf16.mxu0 0
  %630 = vmatpush1.bf16.msra.mxu0 %v138
  %631 = vmatprep.subr.bf16.mxu0 0
  %632 = vmatpush1.bf16.msra.mxu0 %v139
  %633 = vmatprep.subr.bf16.mxu0 0
  %634 = vmatpush1.bf16.msra.mxu0 %v149
  %635 = vmatprep.subr.bf16.mxu0 0
  %636 = vmatpush1.bf16.msra.mxu0 0
  %637 = vmatprep.subr.bf16.mxu0 0
  %638 = vmatpush1.bf16.msra.mxu0 0
  %639 = vmatprep.subr.bf16.mxu0 0
  %640 = vmatpush1.bf16.msra.mxu0 0
  %641 = vmatprep.subr.bf16.mxu0 0
  %642 = vmatpush1.bf16.msra.mxu0 0
  %643 = vmatprep.subr.bf16.mxu0 0
  %644 = vmatpush1.bf16.msra.mxu0 0
  %645 = vmatprep.subr.bf16.mxu0 0
  %646 = vmatpush1.bf16.msra.mxu0 0
  %647 = vmatprep.subr.bf16.mxu0 0
  %648 = vmatpush1.bf16.msra.mxu0 0
  %649 = vmatprep.subr.bf16.mxu0 0
  %650 = vmatpush1.bf16.msra.mxu0 0
  %651 = vmatprep.subr.bf16.mxu0 0
  %652 = vmatpush1.bf16.msra.mxu0 0
  %653 = vmatprep.subr.bf16.mxu0 0
  %654 = vmatpush1.bf16.msra.mxu0 0
  %655 = vmatprep.subr.bf16.mxu0 0
  %656 = vmatpush1.bf16.msra.mxu0 0
  %657 = vmatprep.mubr.bf16.mxu0 0
  %658 = vmatmul.mubr.bf16.gmra.mrb[0].mxu0 %v441
  %v659 = vpop.f32.mrb[0].mxu0
  %v660 = vadd.f32 %v620, %v659
  %v661 = vpop.f32.mrb[0].mxu0
  %v662 = vpop.f32.mrb[0].mxu0
  %v663 = vpop.f32.mrb[0].mxu0
  %664 = vdwg.mxu0
  %v665 = vld [vmem:[%s438] sm:$0xf]
  %v666 = vld [vmem:[%s438 + $0x4] sm:$0x1]
  %v669 = vunpack.c.l.b16 %v665
  %v670 = vunpack.c.l.b16 %v666
  %v671 = vpack.c.b16 %v670, %v669
  %v673 = vshrl.u32 %v671, 16
  %v675 = vshll.u32 %v671, 16
  %v677 = vrot.slane %v675, 1
  %v678 = vor.u32 %v673, %v677
  %v680 = vsel %vm70, %v678, 0
  %682 = vmatprep.subr.bf16.mxu0 0
  %683 = vmatpush1.bf16.msra.mxu0 %v233
  %684 = vmatprep.subr.bf16.mxu0 0
  %685 = vmatpush1.bf16.msra.mxu0 %v234
  %686 = vmatprep.subr.bf16.mxu0 0
  %687 = vmatpush1.bf16.msra.mxu0 %v235
  %688 = vmatprep.subr.bf16.mxu0 0
  %689 = vmatpush1.bf16.msra.mxu0 %v236
  %690 = vmatprep.subr.bf16.mxu0 0
  %691 = vmatpush1.bf16.msra.mxu0 %v246
  %692 = vmatprep.subr.bf16.mxu0 0
  %693 = vmatpush1.bf16.msra.mxu0 0
  %694 = vmatprep.subr.bf16.mxu0 0
  %695 = vmatpush1.bf16.msra.mxu0 0
  %696 = vmatprep.subr.bf16.mxu0 0
  %697 = vmatpush1.bf16.msra.mxu0 0
  %698 = vmatprep.subr.bf16.mxu0 0
  %699 = vmatpush1.bf16.msra.mxu0 0
  %700 = vmatprep.subr.bf16.mxu0 0
  %701 = vmatpush1.bf16.msra.mxu0 0
  %702 = vmatprep.subr.bf16.mxu0 0
  %703 = vmatpush1.bf16.msra.mxu0 0
  %704 = vmatprep.subr.bf16.mxu0 0
  %705 = vmatpush1.bf16.msra.mxu0 0
  %706 = vmatprep.subr.bf16.mxu0 0
  %707 = vmatpush1.bf16.msra.mxu0 0
  %708 = vmatprep.subr.bf16.mxu0 0
  %709 = vmatpush1.bf16.msra.mxu0 0
  %710 = vmatprep.subr.bf16.mxu0 0
  %711 = vmatpush1.bf16.msra.mxu0 0
  %712 = vmatprep.subr.bf16.mxu0 0
  %713 = vmatpush1.bf16.msra.mxu0 0
  %714 = vmatprep.mubr.bf16.mxu0 0
  %715 = vmatmul.mubr.bf16.gmra.mrb[0].mxu0 %v680
  %v716 = vpop.f32.mrb[0].mxu0
  %v717 = vadd.f32 0.0, %v716
  %v718 = vpop.f32.mrb[0].mxu0
  %v719 = vpop.f32.mrb[0].mxu0
  %v720 = vpop.f32.mrb[0].mxu0
  %721 = vdwg.mxu0
  %v722 = vadd.f32 %v660, %v717
  %v723 = vadd.f32 %v722, %v294
  %v724 = vrot.slane %v296, 4
  %v725 = vadd.f32 %v296, %v724
  %v726 = vrot.slane %v725, 2
  %v727 = vadd.f32 %v725, %v726
  %v728 = vrot.slane %v727, 1
  %v729 = vadd.f32 %v727, %v728
  %v730 = vadd.f32 %v729, 0.0
  %v731 = vrot.slane %v435, 4
  %v732 = vadd.f32 %v435, %v731
  %v733 = vrot.slane %v732, 2
  %v734 = vadd.f32 %v732, %v733
  %v735 = vrot.slane %v734, 1
  %v736 = vadd.f32 %v734, %v735
  %v737 = vadd.f32 %v730, %v736
  %v738 = vrot.slane %v584, 4
  %v739 = vadd.f32 %v584, %v738
  %v740 = vrot.slane %v739, 2
  %v741 = vadd.f32 %v739, %v740
  %v742 = vrot.slane %v741, 1
  %v743 = vadd.f32 %v741, %v742
  %v744 = vadd.f32 %v737, %v743
  %v745 = vrot.slane %v723, 4
  %v746 = vadd.f32 %v723, %v745
  %v747 = vrot.slane %v746, 2
  %v748 = vadd.f32 %v746, %v747
  %v749 = vrot.slane %v748, 1
  %v750 = vadd.f32 %v748, %v749
  %v751 = vadd.f32 %v744, %v750
  %752 = vrot.lane.b32.xlu0 %v751, 64
  %v753 = vpop.permute.xlu0 %752
  %v754 = vadd.f32 %v751, %v753
  %755 = vrot.lane.b32.xlu0 %v754, 32
  %v756 = vpop.permute.xlu0 %755
  %v757 = vadd.f32 %v754, %v756
  %758 = vrot.lane.b32.xlu0 %v757, 16
  %v759 = vpop.permute.xlu0 %758
  %v760 = vadd.f32 %v757, %v759
  %761 = vrot.lane.b32.xlu0 %v760, 8
  %v762 = vpop.permute.xlu0 %761
  %v763 = vadd.f32 %v760, %v762
  %v764 = vmul.f32 %v763, 0.001953125
  %v765 = vlaneseq
  %v766 = vshrl.u32 %v765, 7
  %v767 = vsub.s32 0, %v766
  %v768 = vrot.slane %v764, %v767
  %v769 = vsub.f32 %v296, %v768
  %v770 = vmul.f32 %v769, %v769
  %v771 = vrot.slane %v770, 4
  %v772 = vadd.f32 %v770, %v771
  %v773 = vrot.slane %v772, 2
  %v774 = vadd.f32 %v772, %v773
  %v775 = vrot.slane %v774, 1
  %v776 = vadd.f32 %v774, %v775
  %v777 = vadd.f32 %v776, 0.0
  %v778 = vsub.f32 %v435, %v768
  %v779 = vmul.f32 %v778, %v778
  %v780 = vrot.slane %v779, 4
  %v781 = vadd.f32 %v779, %v780
  %v782 = vrot.slane %v781, 2
  %v783 = vadd.f32 %v781, %v782
  %v784 = vrot.slane %v783, 1
  %v785 = vadd.f32 %v783, %v784
  %v786 = vadd.f32 %v777, %v785
  %v787 = vsub.f32 %v584, %v768
  %v788 = vmul.f32 %v787, %v787
  %v789 = vrot.slane %v788, 4
  %v790 = vadd.f32 %v788, %v789
  %v791 = vrot.slane %v790, 2
  %v792 = vadd.f32 %v790, %v791
  %v793 = vrot.slane %v792, 1
  %v794 = vadd.f32 %v792, %v793
  %v795 = vadd.f32 %v786, %v794
  %v796 = vsub.f32 %v723, %v768
  %v797 = vmul.f32 %v796, %v796
  %v798 = vrot.slane %v797, 4
  %v799 = vadd.f32 %v797, %v798
  %v800 = vrot.slane %v799, 2
  %v801 = vadd.f32 %v799, %v800
  %v802 = vrot.slane %v801, 1
  %v803 = vadd.f32 %v801, %v802
  %v804 = vadd.f32 %v795, %v803
  %v805 = vld [vmem:[%s3] sm:$0x1]
  %806 = vrot.lane.b32.xlu0 %v804, 64
  %v807 = vpop.permute.xlu0 %806
  %v808 = vadd.f32 %v804, %v807
  %809 = vrot.lane.b32.xlu0 %v808, 32
  %v810 = vpop.permute.xlu0 %809
  %v811 = vadd.f32 %v808, %v810
  %812 = vrot.lane.b32.xlu0 %v811, 16
  %v813 = vpop.permute.xlu0 %812
  %v814 = vadd.f32 %v811, %v813
  %815 = vrot.lane.b32.xlu0 %v814, 8
  %v816 = vpop.permute.xlu0 %815
  %v817 = vadd.f32 %v814, %v816
  %v818 = vmul.f32 %v817, 0.001953125
  %v819 = vadd.f32 %v818, 1e-05
  %v820 = vrsqrt.pop %v819
  %v821 = vmul.f32 %v805, %v820
  %v822 = vld [vmem:[%s4] sm:$0x1]
  %v824 = vlaneseq
  %v825 = vshrl.u32 %v824, 7
  %v826 = vsub.s32 0, %v825
  %v827 = vrot.slane %v821, %v826
  %v829 = vmul.f32 %v769, %v827
  %v831 = vlaneseq
  %v832 = vshrl.u32 %v831, 7
  %v833 = vsub.s32 0, %v832
  %v834 = vrot.slane %v822, %v833
  %v836 = vadd.f32 %v829, %v834
  %v837 = vmax.f32 %v836, 0.0
  %v838 = vmul.f32 %v778, %v827
  %v839 = vadd.f32 %v838, %v834
  %v840 = vmax.f32 %v839, 0.0
  %842 = vrot.lane.b32.xlu0 %v837, 64
  %v843 = vpop.permute.xlu0 %842
  %v845 = vmax.f32 %v837, %v843
  %847 = vrot.lane.b32.xlu0 %v840, 64
  %v848 = vpop.permute.xlu0 %847
  %v850 = vmax.f32 %v840, %v848
  %v851 = vmax.f32 %v845, %v850
  %vm852 = vcmask 523264
  %853 = vst.msk [vmem:[%s5] sm:$0xff] %vm852, %v851
  %v854 = vmul.f32 %v787, %v827
  %v855 = vadd.f32 %v854, %v834
  %v856 = vmax.f32 %v855, 0.0
  %v857 = vmul.f32 %v796, %v827
  %v858 = vadd.f32 %v857, %v834
  %v859 = vmax.f32 %v858, 0.0
  %861 = vrot.lane.b32.xlu0 %v856, 64
  %v862 = vpop.permute.xlu0 %861
  %v864 = vmax.f32 %v856, %v862
  %866 = vrot.lane.b32.xlu0 %v859, 64
  %v867 = vpop.permute.xlu0 %866
  %v869 = vmax.f32 %v859, %v867
  %v870 = vmax.f32 %v864, %v869
  %871 = vst.msk [vmem:[%s5 + $0x8] sm:$0xff] %vm852, %v870
  // Predicated region
  $region22: #{encoder_block.1} parent=0 // pred_check
    _
  $region23: #{encoder_block.1} parent=0 // pred_check_branch
    %873 = sbr.rel (0) target = $region25
  $region24: #{encoder_block.1} parent=0 // pred_region
    _
  $region25: #{encoder_block.1} parent=0 // pred_fallthru
    _
  // Predicated region
  $region26: #{encoder_block.1} parent=0 // pred_check
    _
  $region27: #{encoder_block.1} parent=0 // pred_check_branch
    %875 = sbr.rel (0) target = $region29
  $region28: #{encoder_block.1} parent=0 // pred_region
    _
  $region29: #{encoder_block.1} parent=0 // pred_fallthru
    _

</llo_original>
